<compile_context>
chip_gen: v7x
topology: tpu7x:2x2x1
jax: 0.10.0
libtpu: 0.0.40
codegen_flags: <defaults>
</compile_context>

<pallas_src>
import functools

import jax
import jax.numpy as jnp
from jax.experimental import pallas as pl
from jax.experimental.pallas import tpu as pltpu


def _round_up(n, m):
    return ((n + m - 1) // m) * m


# ----------------------------------------------------------------------------
# Parameter packing: one zero-padded (rows, lane) slab.
# Row layout:  [W1 | b1 | W2 | b2 | W3 | b3], every block 8-row aligned.
# ----------------------------------------------------------------------------
def _slab_layout(state_dim, hidden, action_dim):
    s_pad = _round_up(max(state_dim, 1), 8)
    h_pad = _round_up(max(hidden, 1), 128)      # 64  -> 128 (lane-dense matmuls)
    a_pad = _round_up(max(action_dim, 1), 128)  # 8   -> 128 (slab width only)
    lane = max(h_pad, a_pad)
    r_w1 = 0
    r_b1 = r_w1 + s_pad
    r_w2 = r_b1 + 8
    r_b2 = r_w2 + h_pad
    r_w3 = r_b2 + 8
    r_b3 = r_w3 + h_pad
    rows = r_b3 + 8
    return dict(state_dim=state_dim, hidden=hidden, action_dim=action_dim,
                s_pad=s_pad, h_pad=h_pad, a_pad=a_pad, lane=lane, rows=rows,
                r_w1=r_w1, r_b1=r_b1, r_w2=r_w2, r_b2=r_b2, r_w3=r_w3, r_b3=r_b3)


def pack_params(params, state_dim, hidden, action_dim, dtype=jnp.float32):
    """Pack all six parameters into one zero-padded (rows, lane) slab.

    Call ONCE per parameter update and reuse the slab for every forward;
    packing per-call costs several extra XLA launches / HBM passes.
    Use dtype=jnp.bfloat16 on v6e/v7x for the fast MXU path (f32 accumulate).
    """
    L = _slab_layout(state_dim, hidden, action_dim)

    def pad2(a, rows, cols):
        a = jnp.asarray(a, dtype)
        if a.ndim == 1:
            a = a.reshape(1, -1)
        return jnp.pad(a, ((0, rows - a.shape[0]), (0, cols - a.shape[1])))

    slab = jnp.concatenate(
        [
            pad2(params["w1"], L["s_pad"], L["lane"]),
            pad2(params["b1"], 8, L["lane"]),
            pad2(params["w2"], L["h_pad"], L["lane"]),
            pad2(params["b2"], 8, L["lane"]),
            pad2(params["w3"], L["h_pad"], L["lane"]),
            pad2(params["b3"], 8, L["lane"]),
        ],
        axis=0,
    )
    assert slab.shape == (L["rows"], L["lane"])
    return slab, L


# ----------------------------------------------------------------------------
# Kernel: fused 3-layer MLP on one (TB, s_pad) batch tile.
# Weights/activations feed the MXU in the slab dtype; bias-add / ReLU and all
# accumulation stay f32 (cheap everywhere, required for a sane v5e bf16 path).
# ----------------------------------------------------------------------------
def _dqn_kernel(x_ref, p_ref, o_ref, *, L):
    f32 = jnp.float32
    dt = p_ref.dtype

    x = x_ref[...]                                           # (TB, s_pad)
    w1 = p_ref[L["r_w1"]:L["r_w1"] + L["s_pad"], :]          # (s_pad, lane)
    b1 = p_ref[L["r_b1"]:L["r_b1"] + 1, :].astype(f32)       # (1, lane)
    w2 = p_ref[L["r_w2"]:L["r_w2"] + L["h_pad"], :]          # (128, lane)
    b2 = p_ref[L["r_b2"]:L["r_b2"] + 1, :].astype(f32)
    w3 = p_ref[L["r_w3"]:L["r_w3"] + L["h_pad"], :]          # (128, lane)
    b3 = p_ref[L["r_b3"]:L["r_b3"] + 1, :].astype(f32)

    h1 = jnp.dot(x, w1, preferred_element_type=f32) + b1
    h1 = jnp.maximum(h1, 0.0)
    h2 = jnp.dot(h1.astype(dt), w2, preferred_element_type=f32) + b2
    h2 = jnp.maximum(h2, 0.0)
    out = jnp.dot(h2.astype(dt), w3, preferred_element_type=f32) + b3

    # Narrow store: only the real action columns go back to HBM.
    o_ref[...] = out[:, :L["action_dim"]].astype(o_ref.dtype)


# ----------------------------------------------------------------------------
# Forward with a pre-packed parameter slab (the fast / recommended path).
# ----------------------------------------------------------------------------
def dqn_forward_packed(x, slab, L, *, block_b=None):
    B, state_dim = x.shape
    assert state_dim == L["state_dim"], "x feature dim does not match packed slab"
    action_dim = L["action_dim"]
    cdt = slab.dtype
    out_dtype = x.dtype

    # Default tile: big tiles amortize the ~0.35us/step grid overhead, and the
    # cdiv(B, 2) split gives v7x's two TensorCores work when B is large enough.
    if block_b is None:
        block_b = min(2048, _round_up(max(pl.cdiv(B, 2), 1), 8))
    block_b = max(8, _round_up(block_b, 8))

    col_ok = (state_dim == L["s_pad"])  # state_dim already 8-aligned

    if col_ok and B <= block_b:
        # Latency fast path (act()): single tile, full-array block shapes
        # bypass the (8,128) rule -> no padding / copying of x at all.
        x_in = x.astype(cdt)
        tb, b_pad, grid = B, B, (1,)
    elif col_ok and B % block_b == 0:
        # Large replay batch that tiles evenly: no padding, pipelined grid.
        x_in = x.astype(cdt)
        tb, b_pad, grid = block_b, B, (B // block_b,)
    else:
        # General path: zero-pad rows (and columns if state_dim % 8 != 0).
        b_pad = _round_up(B, block_b)
        x_in = jnp.pad(x.astype(cdt),
                       ((0, b_pad - B), (0, L["s_pad"] - state_dim)))
        tb, grid = block_b, (b_pad // block_b,)

    x_cols = x_in.shape[1]
    out = pl.pallas_call(
        functools.partial(_dqn_kernel, L=L),
        out_shape=jax.ShapeDtypeStruct((b_pad, action_dim), out_dtype),
        grid=grid,
        in_specs=[
            pl.BlockSpec((tb, x_cols), lambda i: (i, 0)),            # streamed x tile
            pl.BlockSpec((L["rows"], L["lane"]), lambda i: (0, 0)),  # resident params
        ],
        out_specs=pl.BlockSpec((tb, action_dim), lambda i: (i, 0)),  # narrow output
        compiler_params=pltpu.CompilerParams(
            dimension_semantics=("parallel",),
            vmem_limit_bytes=32 << 20,
        ),
    )(x_in, slab)

    return out if b_pad == B else out[:B]


# ----------------------------------------------------------------------------
# Convenience wrapper (packs every call — fine for one-offs; in a training
# loop pack once and call dqn_forward_packed directly).
# ----------------------------------------------------------------------------
def dqn_forward(x, params, *, hidden=64, block_b=None, compute_dtype=jnp.float32):
    B, state_dim = x.shape
    action_dim = jnp.asarray(params["w3"]).shape[1]
    slab, L = pack_params(params, state_dim, hidden, action_dim, dtype=compute_dtype)
    return dqn_forward_packed(x, slab, L, block_b=block_b)


# ----------------------------------------------------------------------------
# Init + reference
# ----------------------------------------------------------------------------
def init_dqn_params(key, state_dim, action_dim, hidden=64):
    """Mimics PyTorch nn.Linear default init (uniform +-1/sqrt(fan_in))."""
    keys = jax.random.split(key, 6)

    def lin(kw, kb, fan_in, fan_out):
        bound = 1.0 / jnp.sqrt(fan_in)
        w = jax.random.uniform(kw, (fan_in, fan_out), jnp.float32, -bound, bound)
        b = jax.random.uniform(kb, (1, fan_out), jnp.float32, -bound, bound)
        return w, b

    w1, b1 = lin(keys[0], keys[1], state_dim, hidden)
    w2, b2 = lin(keys[2], keys[3], hidden, hidden)
    w3, b3 = lin(keys[4], keys[5], hidden, action_dim)
    return {"w1": w1, "b1": b1, "w2": w2, "b2": b2, "w3": w3, "b3": b3}


def dqn_reference(x, p):
    h1 = jnp.maximum(x @ p["w1"] + p["b1"], 0.0)
    h2 = jnp.maximum(h1 @ p["w2"] + p["b2"], 0.0)
    return h2 @ p["w3"] + p["b3"]


if __name__ == "__main__":
    key = jax.random.PRNGKey(0)
    k_params, k1, k2, k3, k4 = jax.random.split(key, 5)

    state_dim, action_dim, hidden = 16, 8, 64
    params = init_dqn_params(k_params, state_dim, action_dim, hidden)

    # Pack once (f32 path), reuse for every forward.
    slab_f32, L = pack_params(params, state_dim, action_dim=action_dim,
                              hidden=hidden, dtype=jnp.float32)

    # 1) Latency fast path: B=8, single tile, no padding.
    x = jax.random.normal(k1, (8, state_dim), jnp.float32)
    out = jax.block_until_ready(dqn_forward_packed(x, slab_f32, L))
    assert out.shape == (8, action_dim)
    assert jnp.allclose(out, dqn_reference(x, params), atol=1e-5, rtol=1e-5), \
        "mismatch (B=8 fast path)"

    # 2) act()-style B=1 (full-array block shapes, no padding).
    x1 = jax.random.normal(k2, (1, state_dim), jnp.float32)
    out1 = jax.block_until_ready(dqn_forward_packed(x1, slab_f32, L))
    assert out1.shape == (1, action_dim)
    assert jnp.allclose(out1, dqn_reference(x1, params), atol=1e-5, rtol=1e-5), \
        "mismatch (B=1)"

    # 3) Even multi-tile batch: B=16 with block_b=8 -> grid=(2,), no padding.
    x16 = jax.random.normal(k3, (16, state_dim), jnp.float32)
    out16 = jax.block_until_ready(dqn_forward_packed(x16, slab_f32, L, block_b=8))
    assert out16.shape == (16, action_dim)
    assert jnp.allclose(out16, dqn_reference(x16, params), atol=1e-5, rtol=1e-5), \
        "mismatch (B=16 multi-tile)"

    # 4) Ragged batch exercising the row-padded pipelined grid: B=50.
    x50 = jax.random.normal(k4, (50, state_dim), jnp.float32)
    out50 = jax.block_until_ready(dqn_forward_packed(x50, slab_f32, L))
    assert out50.shape == (50, action_dim)
    assert jnp.allclose(out50, dqn_reference(x50, params), atol=1e-5, rtol=1e-5), \
        "mismatch (B=50 padded grid)"

    # 5) bf16 compute path (recommended on v6e/v7x): bf16 MXU inputs,
    #    f32 accumulation — looser tolerance vs the f32 reference.
    slab_bf16, Lb = pack_params(params, state_dim, action_dim=action_dim,
                                hidden=hidden, dtype=jnp.bfloat16)
    out_bf = jax.block_until_ready(dqn_forward_packed(x50, slab_bf16, Lb))
    assert out_bf.shape == (50, action_dim)
    assert jnp.allclose(out_bf, dqn_reference(x50, params), atol=5e-2, rtol=5e-2), \
        "mismatch (bf16 path)"

    print("KERNEL_OK")
</pallas_src>

<mosaic_0001>
module attributes {stable_mosaic.version = 11 : i64} {
  func.func @_dqn_kernel(%arg0: i32, %arg1: memref<8x16xf32, #tpu.memory_space<vmem>>, %arg2: memref<296x128xf32, #tpu.memory_space<vmem>>, %arg3: memref<8x8xf32, #tpu.memory_space<vmem>>) attributes {dimension_semantics = [#tpu.dimension_semantics<parallel>], iteration_bounds = array<i64: 1>, scalar_prefetch = 0 : i64, scratch_operands = 0 : i64, tpu.core_type = #tpu.core_type<tc>, window_params = [{transform_indices = @transform_0, window_bounds = array<i64: 8, 16>}, {pipeline_mode = #tpu.pipeline_mode<synchronous>, transform_indices = @transform_1, window_bounds = array<i64: 296, 128>}, {transform_indices = @transform_2, window_bounds = array<i64: 8, 8>}]} {
    %c0 = arith.constant 0 : index
    %c0_0 = arith.constant 0 : index
    %0 = vector.load %arg1[%c0, %c0_0] : memref<8x16xf32, #tpu.memory_space<vmem>>, vector<8x16xf32>
    %c0_1 = arith.constant 0 : index
    %c0_2 = arith.constant 0 : index
    %1 = vector.load %arg2[%c0_1, %c0_2] : memref<296x128xf32, #tpu.memory_space<vmem>>, vector<16x128xf32>
    %c16 = arith.constant 16 : index
    %c0_3 = arith.constant 0 : index
    %2 = vector.load %arg2[%c16, %c0_3] : memref<296x128xf32, #tpu.memory_space<vmem>>, vector<1x128xf32>
    %c24 = arith.constant 24 : index
    %c0_4 = arith.constant 0 : index
    %3 = vector.load %arg2[%c24, %c0_4] : memref<296x128xf32, #tpu.memory_space<vmem>>, vector<128x128xf32>
    %c152 = arith.constant 152 : index
    %c0_5 = arith.constant 0 : index
    %4 = vector.load %arg2[%c152, %c0_5] : memref<296x128xf32, #tpu.memory_space<vmem>>, vector<1x128xf32>
    %c160 = arith.constant 160 : index
    %c0_6 = arith.constant 0 : index
    %5 = vector.load %arg2[%c160, %c0_6] : memref<296x128xf32, #tpu.memory_space<vmem>>, vector<128x128xf32>
    %c288 = arith.constant 288 : index
    %c0_7 = arith.constant 0 : index
    %6 = vector.load %arg2[%c288, %c0_7] : memref<296x128xf32, #tpu.memory_space<vmem>>, vector<1x128xf32>
    %cst = arith.constant dense<0.000000e+00> : vector<8x128xf32>
    %7 = tpu.matmul %0, %1, %cst {dimension_numbers = #tpu.dot_dimension_numbers<[1], [0], [0], [1], [0, 0, 1, 1], [], []>} : vector<8x16xf32>, vector<16x128xf32>, vector<8x128xf32> -> vector<8x128xf32>
    %8 = vector.broadcast %2 : vector<1x128xf32> to vector<8x128xf32>
    %9 = arith.addf %7, %8 : vector<8x128xf32>
    %cst_8 = arith.constant 0.000000e+00 : f32
    %10 = vector.broadcast %cst_8 : f32 to vector<8x128xf32>
    %11 = arith.maximumf %9, %10 : vector<8x128xf32>
    %cst_9 = arith.constant dense<0.000000e+00> : vector<8x128xf32>
    %12 = tpu.matmul %11, %3, %cst_9 {dimension_numbers = #tpu.dot_dimension_numbers<[1], [0], [0], [1], [0, 0, 1, 1], [], []>} : vector<8x128xf32>, vector<128x128xf32>, vector<8x128xf32> -> vector<8x128xf32>
    %13 = vector.broadcast %4 : vector<1x128xf32> to vector<8x128xf32>
    %14 = arith.addf %12, %13 : vector<8x128xf32>
    %cst_10 = arith.constant 0.000000e+00 : f32
    %15 = vector.broadcast %cst_10 : f32 to vector<8x128xf32>
    %16 = arith.maximumf %14, %15 : vector<8x128xf32>
    %cst_11 = arith.constant dense<0.000000e+00> : vector<8x128xf32>
    %17 = tpu.matmul %16, %5, %cst_11 {dimension_numbers = #tpu.dot_dimension_numbers<[1], [0], [0], [1], [0, 0, 1, 1], [], []>} : vector<8x128xf32>, vector<128x128xf32>, vector<8x128xf32> -> vector<8x128xf32>
    %18 = vector.broadcast %6 : vector<1x128xf32> to vector<8x128xf32>
    %19 = arith.addf %17, %18 : vector<8x128xf32>
    %20 = vector.extract_strided_slice %19 {offsets = [0, 0], sizes = [8, 8], strides = [1, 1]} : vector<8x128xf32> to vector<8x8xf32>
    %c0_12 = arith.constant 0 : index
    %c0_13 = arith.constant 0 : index
    %21 = vector.load %arg3[%c0_12, %c0_13] : memref<8x8xf32, #tpu.memory_space<vmem>>, vector<8x8xf32>
    tpu.vector_store %arg3[%c0_12, %c0_13], %20 {strides = array<i32>} : memref<8x8xf32, #tpu.memory_space<vmem>>, vector<8x8xf32>,
    return
  }
  func.func @transform_0(%arg0: i32) -> (i32, i32) {
    %c0_i32 = arith.constant 0 : i32
    %c0_i32_0 = arith.constant 0 : i32
    return %arg0, %c0_i32 : i32, i32
  }
  func.func @transform_1(%arg0: i32) -> (i32, i32) {
    %c0_i32 = arith.constant 0 : i32
    %c0_i32_0 = arith.constant 0 : i32
    %c0_i32_1 = arith.constant 0 : i32
    return %c0_i32, %c0_i32_0 : i32, i32
  }
  func.func @transform_2(%arg0: i32) -> (i32, i32) {
    %c0_i32 = arith.constant 0 : i32
    %c0_i32_0 = arith.constant 0 : i32
    return %arg0, %c0_i32 : i32, i32
  }
}

</mosaic_0001>

<llo_original>
// kernel: tpu_custom_call.1
$region0: #{tpu_custom_call.1}
  #allocation0 [shape = 'u32[]', space=smem, size = 0x4, offset = 0x4, fixed_abs, tag = 'smem constant byte address 0x4 - core index']
  #allocation1 [shape = 'u32[144,128]{1,0:T(1,128)}', space=vmem, size = 0x12000, scoped, tag = 'internal scratch']
  %s0 = inlined_call_operand.hbm [shape: f32[8,16], index: 0, kind: input, shape index: {}]
  %s1 = inlined_call_operand.hbm [shape: f32[296,128], index: 1, kind: input, shape index: {}]
  %s2 = inlined_call_operand.hbm [shape: f32[8,8], index: 2, kind: output, shape index: {}]
  %s3 = sld [smem:[#allocation0]]
  $region26: #{tpu_custom_call.1} parent=0
    _
  %s5 = ssub.s32 1, %s3
  %s6 = scalar_select 0, %s5, %s3
  $region1: #{tpu_custom_call.1} parent=0
    #allocation2 [shape = 'u8[4096]{0}', space=vmem, size = 0x1000, scoped, tag = 'input window, operand 0, single buffered']
    #allocation3 [shape = 's32[1]{0}', space=sflag, size = 0x4, scoped, tag = 'scoped memory for tpu_custom_call.1']
    #allocation4 [shape = 's32[1]{0}', space=sflag, size = 0x4, scoped, tag = 'scoped memory for tpu_custom_call.1']
    #allocation5 [shape = 'u8[151552]{0}', space=vmem, size = 0x25000, scoped, tag = 'input window, operand 1, single buffered']
    #allocation6 [shape = 's32[1]{0}', space=sflag, size = 0x4, scoped, tag = 'scoped memory for tpu_custom_call.1']
    #allocation7 [shape = 'u8[4096]{0}', space=vmem, size = 0x1000, scoped, tag = 'output window, operand 0, single buffered']
    %7 = vsyncpa [#allocation3], 0
    %8 = vsyncpa [#allocation6], 0
    %9 = vsyncpa [#allocation4], 0
    // Predicated region
    $region2: #{tpu_custom_call.1} parent=1 // pred_check
      _
    $region3: #{tpu_custom_call.1} parent=1 // pred_check_branch
      %11 = sbr.rel (0) target = $region5
    $region4: #{tpu_custom_call.1} parent=1 // pred_region
      %s13 = ssub.s32 128, 128
      %14 = vsyncadd [#allocation3], %s13
      %s16 = sshll.u32 [#allocation2], 4
      %s17 = int_to_ptr.vmem [resolvable:$true] %s16
      %19 = dma.hbm_to_vmem [thread:$0]  %s0, 128, %s17, [#allocation3]
    $region5: #{tpu_custom_call.1} parent=1 // pred_fallthru
      _
    // Predicated region
    $region6: #{tpu_custom_call.1} parent=1 // pred_check
      _
    $region7: #{tpu_custom_call.1} parent=1 // pred_check_branch
      %21 = sbr.rel (0) target = $region9
    $region8: #{tpu_custom_call.1} parent=1 // pred_region
      %s23 = ssub.s32 4736, 4736
      %24 = vsyncadd [#allocation6], %s23
      %s25 = sshll.u32 [#allocation5], 4
      %s26 = int_to_ptr.vmem [resolvable:$true] %s25
      %31 = dma.hbm_to_vmem [thread:$0]  %s1, 4736, %s26, [#allocation6], 128, 128, 8
    $region9: #{tpu_custom_call.1} parent=1 // pred_fallthru
      _
    // Predicated region
    $region10: #{tpu_custom_call.1} parent=1 // pred_check
      _
    $region11: #{tpu_custom_call.1} parent=1 // pred_check_branch
      %33 = sbr.rel (0) target = $region13
    $region12: #{tpu_custom_call.1} parent=1 // pred_region
      %34 = dma.done [#allocation3], 128
    $region13: #{tpu_custom_call.1} parent=1 // pred_fallthru
      _
    // Predicated region
    $region14: #{tpu_custom_call.1} parent=1 // pred_check
      _
    $region15: #{tpu_custom_call.1} parent=1 // pred_check_branch
      %36 = sbr.rel (0) target = $region17
    $region16: #{tpu_custom_call.1} parent=1 // pred_region
      %37 = dma.done [#allocation6], 4736
    $region17: #{tpu_custom_call.1} parent=1 // pred_fallthru
      _
    %v38 = vld [vmem:[#allocation2] sm:$0xff]
    %v39 = vld [vmem:[#allocation5] sm:$0xff]
    %v40 = vld [vmem:[#allocation5 + $0x8] sm:$0xff]
    %v41 = vld [vmem:[#allocation5 + $0x10] sm:$0x1]
    %v42 = vld [vmem:[#allocation5 + $0x18] sm:$0xff]
    %v43 = vld [vmem:[#allocation5 + $0x20] sm:$0xff]
    %v44 = vld [vmem:[#allocation5 + $0x28] sm:$0xff]
    %v45 = vld [vmem:[#allocation5 + $0x30] sm:$0xff]
    %v46 = vld [vmem:[#allocation5 + $0x38] sm:$0xff]
    %v47 = vld [vmem:[#allocation5 + $0x40] sm:$0xff]
    %v48 = vld [vmem:[#allocation5 + $0x48] sm:$0xff]
    %v49 = vld [vmem:[#allocation5 + $0x50] sm:$0xff]
    %v50 = vld [vmem:[#allocation5 + $0x58] sm:$0xff]
    %v51 = vld [vmem:[#allocation5 + $0x60] sm:$0xff]
    %v52 = vld [vmem:[#allocation5 + $0x68] sm:$0xff]
    %v53 = vld [vmem:[#allocation5 + $0x70] sm:$0xff]
    %v54 = vld [vmem:[#allocation5 + $0x78] sm:$0xff]
    %v55 = vld [vmem:[#allocation5 + $0x80] sm:$0xff]
    %v56 = vld [vmem:[#allocation5 + $0x88] sm:$0xff]
    %v57 = vld [vmem:[#allocation5 + $0x90] sm:$0xff]
    %v58 = vld [vmem:[#allocation5 + $0x98] sm:$0x1]
    %v59 = vld [vmem:[#allocation5 + $0xa0] sm:$0xff]
    %v60 = vld [vmem:[#allocation5 + $0xa8] sm:$0xff]
    %v61 = vld [vmem:[#allocation5 + $0xb0] sm:$0xff]
    %v62 = vld [vmem:[#allocation5 + $0xb8] sm:$0xff]
    %v63 = vld [vmem:[#allocation5 + $0xc0] sm:$0xff]
    %v64 = vld [vmem:[#allocation5 + $0xc8] sm:$0xff]
    %v65 = vld [vmem:[#allocation5 + $0xd0] sm:$0xff]
    %v66 = vld [vmem:[#allocation5 + $0xd8] sm:$0xff]
    %v67 = vld [vmem:[#allocation5 + $0xe0] sm:$0xff]
    %v68 = vld [vmem:[#allocation5 + $0xe8] sm:$0xff]
    %v69 = vld [vmem:[#allocation5 + $0xf0] sm:$0xff]
    %v70 = vld [vmem:[#allocation5 + $0xf8] sm:$0xff]
    %v71 = vld [vmem:[#allocation5 + $0x100] sm:$0xff]
    %v72 = vld [vmem:[#allocation5 + $0x108] sm:$0xff]
    %v73 = vld [vmem:[#allocation5 + $0x110] sm:$0xff]
    %v74 = vld [vmem:[#allocation5 + $0x118] sm:$0xff]
    %v75 = vld [vmem:[#allocation5 + $0x120] sm:$0x1]
    %v76 = vlaneseq
    %v77 = vshrl.u32 %v76, 7
    %v78 = vsub.s32 0, %v77
    %v79 = vrot.slane %v41, %v78
    %vm80 = vcmask 130048
    %v82 = vsel %vm80, %v38, 0
    %84 = vmatprep.subr.mxu0 0.0
    %85 = vmatpush1.msra.mxu0 %v39
    %86 = vmatprep.subr.mxu0 0.0
    %87 = vmatpush1.msra.mxu0 %v40
    %88 = vmatprep.subr.mxu0 0.0
    %89 = vmatpush1.msra.mxu0 0.0
    %90 = vmatprep.subr.mxu0 0.0
    %91 = vmatpush1.msra.mxu0 0.0
    %92 = vmatprep.subr.mxu0 0.0
    %93 = vmatpush1.msra.mxu0 0.0
    %94 = vmatprep.subr.mxu0 0.0
    %95 = vmatpush1.msra.mxu0 0.0
    %96 = vmatprep.subr.mxu0 0.0
    %97 = vmatpush1.msra.mxu0 0.0
    %98 = vmatprep.subr.mxu0 0.0
    %99 = vmatpush1.msra.mxu0 0.0
    %100 = vmatprep.subr.mxu0 0.0
    %101 = vmatpush1.msra.mxu0 0.0
    %102 = vmatprep.subr.mxu0 0.0
    %103 = vmatpush1.msra.mxu0 0.0
    %104 = vmatprep.subr.mxu0 0.0
    %105 = vmatpush1.msra.mxu0 0.0
    %106 = vmatprep.subr.mxu0 0.0
    %107 = vmatpush1.msra.mxu0 0.0
    %108 = vmatprep.subr.mxu0 0.0
    %109 = vmatpush1.msra.mxu0 0.0
    %110 = vmatprep.subr.mxu0 0.0
    %111 = vmatpush1.msra.mxu0 0.0
    %112 = vmatprep.subr.mxu0 0.0
    %113 = vmatpush1.msra.mxu0 0.0
    %114 = vmatprep.subr.mxu0 0.0
    %115 = vmatpush1.msra.mxu0 0.0
    %116 = vmatprep.subr.mxu0 0.0
    %117 = vmatpush1.msra.mxu0 0.0
    %118 = vmatprep.subr.mxu0 0.0
    %119 = vmatpush1.msra.mxu0 0.0
    %120 = vmatprep.subr.mxu0 0.0
    %121 = vmatpush1.msra.mxu0 0.0
    %122 = vmatprep.subr.mxu0 0.0
    %123 = vmatpush1.msra.mxu0 0.0
    %124 = vmatprep.subr.mxu0 0.0
    %125 = vmatpush1.msra.mxu0 0.0
    %126 = vmatprep.subr.mxu0 0.0
    %127 = vmatpush1.msra.mxu0 0.0
    %128 = vmatprep.subr.mxu0 0.0
    %129 = vmatpush1.msra.mxu0 0.0
    %130 = vmatprep.subr.mxu0 0.0
    %131 = vmatpush1.msra.mxu0 0.0
    %132 = vmatprep.subr.mxu0 0.0
    %133 = vmatpush1.msra.mxu0 0.0
    %134 = vmatprep.subr.mxu0 0.0
    %135 = vmatpush1.msra.mxu0 0.0
    %136 = vmatprep.subr.mxu0 0.0
    %137 = vmatpush1.msra.mxu0 0.0
    %138 = vmatprep.subr.mxu0 0.0
    %139 = vmatpush1.msra.mxu0 0.0
    %140 = vmatprep.subr.mxu0 0.0
    %141 = vmatpush1.msra.mxu0 0.0
    %142 = vmatprep.subr.mxu0 0.0
    %143 = vmatpush1.msra.mxu0 0.0
    %144 = vmatprep.subr.mxu0 0.0
    %145 = vmatpush1.msra.mxu0 0.0
    %146 = vmatprep.subr.mxu0 0.0
    %147 = vmatpush1.msra.mxu0 0.0
    %148 = vmatprep.mubr.f32.mxu0 0.0
    %149 = vmatmul.mubr.f32.gmra.mrb[0].mxu0 %v82
    %v150 = vpop.f32.mrb[0].mxu0
    %v151 = vadd.f32 %v79, %v150
    %v152 = vpop.f32.mrb[0].mxu0
    %153 = vdwg.mxu0
    %v154 = vmax.f32 %v151, 0.0
    %v155 = vlaneseq
    %v156 = vshrl.u32 %v155, 7
    %v157 = vsub.s32 0, %v156
    %v158 = vrot.slane %v58, %v157
    %159 = vmatprep.subr.mxu0 0.0
    %160 = vmatpush1.msra.mxu0 %v42
    %161 = vmatprep.subr.mxu0 0.0
    %162 = vmatpush1.msra.mxu0 %v43
    %163 = vmatprep.subr.mxu0 0.0
    %164 = vmatpush1.msra.mxu0 %v44
    %165 = vmatprep.subr.mxu0 0.0
    %166 = vmatpush1.msra.mxu0 %v45
    %167 = vmatprep.subr.mxu0 0.0
    %168 = vmatpush1.msra.mxu0 %v46
    %169 = vmatprep.subr.mxu0 0.0
    %170 = vmatpush1.msra.mxu0 %v47
    %171 = vmatprep.subr.mxu0 0.0
    %172 = vmatpush1.msra.mxu0 %v48
    %173 = vmatprep.subr.mxu0 0.0
    %174 = vmatpush1.msra.mxu0 %v49
    %175 = vmatprep.subr.mxu0 0.0
    %176 = vmatpush1.msra.mxu0 %v50
    %177 = vmatprep.subr.mxu0 0.0
    %178 = vmatpush1.msra.mxu0 %v51
    %179 = vmatprep.subr.mxu0 0.0
    %180 = vmatpush1.msra.mxu0 %v52
    %181 = vmatprep.subr.mxu0 0.0
    %182 = vmatpush1.msra.mxu0 %v53
    %183 = vmatprep.subr.mxu0 0.0
    %184 = vmatpush1.msra.mxu0 %v54
    %185 = vmatprep.subr.mxu0 0.0
    %186 = vmatpush1.msra.mxu0 %v55
    %187 = vmatprep.subr.mxu0 0.0
    %188 = vmatpush1.msra.mxu0 %v56
    %189 = vmatprep.subr.mxu0 0.0
    %190 = vmatpush1.msra.mxu0 %v57
    %191 = vmatprep.subr.mxu0 0.0
    %192 = vmatpush1.msra.mxu0 0.0
    %193 = vmatprep.subr.mxu0 0.0
    %194 = vmatpush1.msra.mxu0 0.0
    %195 = vmatprep.subr.mxu0 0.0
    %196 = vmatpush1.msra.mxu0 0.0
    %197 = vmatprep.subr.mxu0 0.0
    %198 = vmatpush1.msra.mxu0 0.0
    %199 = vmatprep.subr.mxu0 0.0
    %200 = vmatpush1.msra.mxu0 0.0
    %201 = vmatprep.subr.mxu0 0.0
    %202 = vmatpush1.msra.mxu0 0.0
    %203 = vmatprep.subr.mxu0 0.0
    %204 = vmatpush1.msra.mxu0 0.0
    %205 = vmatprep.subr.mxu0 0.0
    %206 = vmatpush1.msra.mxu0 0.0
    %207 = vmatprep.subr.mxu0 0.0
    %208 = vmatpush1.msra.mxu0 0.0
    %209 = vmatprep.subr.mxu0 0.0
    %210 = vmatpush1.msra.mxu0 0.0
    %211 = vmatprep.subr.mxu0 0.0
    %212 = vmatpush1.msra.mxu0 0.0
    %213 = vmatprep.subr.mxu0 0.0
    %214 = vmatpush1.msra.mxu0 0.0
    %215 = vmatprep.subr.mxu0 0.0
    %216 = vmatpush1.msra.mxu0 0.0
    %217 = vmatprep.subr.mxu0 0.0
    %218 = vmatpush1.msra.mxu0 0.0
    %219 = vmatprep.subr.mxu0 0.0
    %220 = vmatpush1.msra.mxu0 0.0
    %221 = vmatprep.subr.mxu0 0.0
    %222 = vmatpush1.msra.mxu0 0.0
    %223 = vmatprep.mubr.f32.mxu0 0.0
    %224 = vmatmul.mubr.f32.gmra.mrb[0].mxu0 %v154
    %v225 = vpop.f32.mrb[0].mxu0
    %v226 = vadd.f32 %v158, %v225
    %v227 = vpop.f32.mrb[0].mxu0
    %228 = vdwg.mxu0
    %v229 = vmax.f32 %v226, 0.0
    %v230 = vlaneseq
    %v231 = vshrl.u32 %v230, 7
    %v232 = vsub.s32 0, %v231
    %v233 = vrot.slane %v75, %v232
    %234 = vmatprep.subr.mxu0 0.0
    %235 = vmatpush1.msra.mxu0 %v59
    %236 = vmatprep.subr.mxu0 0.0
    %237 = vmatpush1.msra.mxu0 %v60
    %238 = vmatprep.subr.mxu0 0.0
    %239 = vmatpush1.msra.mxu0 %v61
    %240 = vmatprep.subr.mxu0 0.0
    %241 = vmatpush1.msra.mxu0 %v62
    %242 = vmatprep.subr.mxu0 0.0
    %243 = vmatpush1.msra.mxu0 %v63
    %244 = vmatprep.subr.mxu0 0.0
    %245 = vmatpush1.msra.mxu0 %v64
    %246 = vmatprep.subr.mxu0 0.0
    %247 = vmatpush1.msra.mxu0 %v65
    %248 = vmatprep.subr.mxu0 0.0
    %249 = vmatpush1.msra.mxu0 %v66
    %250 = vmatprep.subr.mxu0 0.0
    %251 = vmatpush1.msra.mxu0 %v67
    %252 = vmatprep.subr.mxu0 0.0
    %253 = vmatpush1.msra.mxu0 %v68
    %254 = vmatprep.subr.mxu0 0.0
    %255 = vmatpush1.msra.mxu0 %v69
    %256 = vmatprep.subr.mxu0 0.0
    %257 = vmatpush1.msra.mxu0 %v70
    %258 = vmatprep.subr.mxu0 0.0
    %259 = vmatpush1.msra.mxu0 %v71
    %260 = vmatprep.subr.mxu0 0.0
    %261 = vmatpush1.msra.mxu0 %v72
    %262 = vmatprep.subr.mxu0 0.0
    %263 = vmatpush1.msra.mxu0 %v73
    %264 = vmatprep.subr.mxu0 0.0
    %265 = vmatpush1.msra.mxu0 %v74
    %266 = vmatprep.subr.mxu0 0.0
    %267 = vmatpush1.msra.mxu0 0.0
    %268 = vmatprep.subr.mxu0 0.0
    %269 = vmatpush1.msra.mxu0 0.0
    %270 = vmatprep.subr.mxu0 0.0
    %271 = vmatpush1.msra.mxu0 0.0
    %272 = vmatprep.subr.mxu0 0.0
    %273 = vmatpush1.msra.mxu0 0.0
    %274 = vmatprep.subr.mxu0 0.0
    %275 = vmatpush1.msra.mxu0 0.0
    %276 = vmatprep.subr.mxu0 0.0
    %277 = vmatpush1.msra.mxu0 0.0
    %278 = vmatprep.subr.mxu0 0.0
    %279 = vmatpush1.msra.mxu0 0.0
    %280 = vmatprep.subr.mxu0 0.0
    %281 = vmatpush1.msra.mxu0 0.0
    %282 = vmatprep.subr.mxu0 0.0
    %283 = vmatpush1.msra.mxu0 0.0
    %284 = vmatprep.subr.mxu0 0.0
    %285 = vmatpush1.msra.mxu0 0.0
    %286 = vmatprep.subr.mxu0 0.0
    %287 = vmatpush1.msra.mxu0 0.0
    %288 = vmatprep.subr.mxu0 0.0
    %289 = vmatpush1.msra.mxu0 0.0
    %290 = vmatprep.subr.mxu0 0.0
    %291 = vmatpush1.msra.mxu0 0.0
    %292 = vmatprep.subr.mxu0 0.0
    %293 = vmatpush1.msra.mxu0 0.0
    %294 = vmatprep.subr.mxu0 0.0
    %295 = vmatpush1.msra.mxu0 0.0
    %296 = vmatprep.subr.mxu0 0.0
    %297 = vmatpush1.msra.mxu0 0.0
    %298 = vmatprep.mubr.f32.mxu0 0.0
    %299 = vmatmul.mubr.f32.gmra.mrb[0].mxu0 %v229
    %v300 = vpop.f32.mrb[0].mxu0
    %v301 = vadd.f32 %v233, %v300
    %v302 = vpop.f32.mrb[0].mxu0
    %303 = vdwg.mxu0
    %vm304 = vcmask 64512
    %305 = vst.msk [vmem:[#allocation7] sm:$0xff] %vm304, %v301
    // Predicated region
    $region18: #{tpu_custom_call.1} parent=1 // pred_check
      _
    $region19: #{tpu_custom_call.1} parent=1 // pred_check_branch
      %307 = sbr.rel (0) target = $region21
    $region20: #{tpu_custom_call.1} parent=1 // pred_region
      %s309 = ssub.s32 128, 128
      %310 = vsyncadd [#allocation4], %s309
      %s312 = sshll.u32 [#allocation7], 4
      %s313 = int_to_ptr.vmem [resolvable:$true] %s312
      %315 = dma.vmem_to_hbm [thread:$0]  %s313, 128, %s2, [#allocation4]
    $region21: #{tpu_custom_call.1} parent=1 // pred_fallthru
      _
    // Predicated region
    $region22: #{tpu_custom_call.1} parent=1 // pred_check
      _
    $region23: #{tpu_custom_call.1} parent=1 // pred_check_branch
      %317 = sbr.rel (0) target = $region25
    $region24: #{tpu_custom_call.1} parent=1 // pred_region
      %318 = dma.done [#allocation4], 128
    $region25: #{tpu_custom_call.1} parent=1 // pred_fallthru
      _
    %319 = vsyncpa [#allocation3], 1
    %320 = vsyncpa [#allocation6], 1
    %321 = vsyncpa [#allocation4], 1

</llo_original>
